<compile_context>
chip_gen: v5e
topology: v5e:2x2
jax: 0.10.0
libtpu: 0.0.40
codegen_flags: <defaults>
</compile_context>

<pallas_src>
import math
import numpy as np
import jax
import jax.numpy as jnp
from jax.experimental import pallas as pl
from jax.experimental.pallas import tpu as pltpu

# ---------------- configuration (small, consistent with the module) -----------
S = 8            # sequence length
N = 2            # batch
E = 32           # d_model
NHEAD = 4
HEAD_DIM = E // NHEAD
FF = 64          # dim_feedforward
LN_EPS = 1e-5
R = S * N        # flattened rows (s-major: row r = s*N + n)


# ------------------------------- Pallas kernel --------------------------------
def encoder_layer_kernel(src_ref, pos_ref,
                         wqk_ref, bqk_ref,
                         wv_ref, bv_ref,
                         wo_ref, bo_ref,
                         w1_ref, b1_ref, w2_ref, b2_ref,
                         g1_ref, be1_ref, g2_ref, be2_ref,
                         out_ref):
    x = src_ref[...].astype(jnp.float32)                     # (R, E)
    qk_in = x + pos_ref[...].astype(jnp.float32)             # with_pos_embed (q = k)

    # ---- fused Q/K projection (scale already folded into wq/bq) + V projection ----
    qk = jnp.dot(qk_in, wqk_ref[...],
                 preferred_element_type=jnp.float32) + bqk_ref[...]   # (R, 2E)
    v = jnp.dot(x, wv_ref[...],
                preferred_element_type=jnp.float32) + bv_ref[...]     # (R, E)

    # ---- static same-batch additive bias for the s-major flattened rows (hoisted) ----
    r_idx = jax.lax.broadcasted_iota(jnp.int32, (R, R), 0)
    c_idx = jax.lax.broadcasted_iota(jnp.int32, (R, R), 1)
    same_batch = (r_idx % N) == (c_idx % N)                   # (R, R) bool
    mask_bias = jnp.where(same_batch, jnp.float32(0.0), jnp.float32(-1e30))

    wo = wo_ref[...]                                          # (E, E), loaded once

    # ---- multi-head attention: accumulate each head through its W_o slice (no concat) ----
    attn = None
    for h in range(NHEAD):                                    # static loop over heads
        hs = slice(h * HEAD_DIM, (h + 1) * HEAD_DIM)
        ks = slice(E + h * HEAD_DIM, E + (h + 1) * HEAD_DIM)
        q_h = qk[:, hs]                                       # (R, D) — pre-scaled
        k_h = qk[:, ks]                                       # (R, D)
        v_h = v[:, hs]                                        # (R, D)

        # scores[r, c] = sum_d q_h[r, d] * k_h[c, d]
        s_h = jax.lax.dot_general(q_h, k_h, (((1,), (1,)), ((), ())),
                                  preferred_element_type=jnp.float32)  # (R, R)
        s_h = s_h + mask_bias                                 # no cross-batch attention
        s_h = s_h - jnp.max(s_h, axis=-1, keepdims=True)
        p_h = jnp.exp(s_h)                                    # unnormalized probs
        l_h = jnp.sum(p_h, axis=-1, keepdims=True)            # (R, 1) softmax denom
        o_h = jnp.dot(p_h, v_h, preferred_element_type=jnp.float32)    # (R, D)
        o_h = o_h * pl.reciprocal(l_h, approx=True)           # deferred normalization (EUP)

        contrib = jnp.dot(o_h, wo[h * HEAD_DIM:(h + 1) * HEAD_DIM, :],
                          preferred_element_type=jnp.float32)  # (R, E)
        attn = contrib if attn is None else attn + contrib
    attn = attn + bo_ref[...]

    # ---- residual + LayerNorm1 (dropout1 is identity at inference) ----
    y = x + attn
    mu = jnp.mean(y, axis=-1, keepdims=True)
    var = jnp.mean((y - mu) ** 2, axis=-1, keepdims=True)
    y = (y - mu) * jax.lax.rsqrt(var + LN_EPS) * g1_ref[...] + be1_ref[...]

    # ---- feed-forward: linear1 -> relu -> linear2 (dropout is identity) ----
    h1 = jnp.dot(y, w1_ref[...], preferred_element_type=jnp.float32) + b1_ref[...]
    h1 = jnp.maximum(h1, 0.0)
    ff = jnp.dot(h1, w2_ref[...], preferred_element_type=jnp.float32) + b2_ref[...]

    # ---- residual + LayerNorm2 (dropout2 is identity at inference) ----
    z = y + ff
    mu2 = jnp.mean(z, axis=-1, keepdims=True)
    var2 = jnp.mean((z - mu2) ** 2, axis=-1, keepdims=True)
    z = (z - mu2) * jax.lax.rsqrt(var2 + LN_EPS) * g2_ref[...] + be2_ref[...]

    out_ref[...] = z.astype(out_ref.dtype)


# ------------------------------ wrapper ----------------------------------------
def transformer_encoder_layer(src, pos, params):
    """src, pos: (S, N, E). Returns (S, N, E)."""
    s, n, e = src.shape
    assert (s, n, e) == (S, N, E)
    rows = s * n

    # Free leading-dim flattening — no HBM transpose needed.
    src2d = src.reshape(rows, e)
    pos2d = pos.reshape(rows, e)

    p = params
    scale = 1.0 / math.sqrt(e // NHEAD)
    # Fuse Q||K projection weights; fold the attention scale into the Q half.
    wqk = jnp.concatenate([p["wq"] * scale, p["wk"]], axis=1)   # (E, 2E)
    bqk = jnp.concatenate([p["bq"] * scale, p["bk"]], axis=1)   # (1, 2E)

    vmem_spec = pl.BlockSpec(memory_space=pltpu.MemorySpace.VMEM)
    n_inputs = 16

    out2d = pl.pallas_call(
        encoder_layer_kernel,
        out_shape=jax.ShapeDtypeStruct((rows, e), src.dtype),
        in_specs=[vmem_spec] * n_inputs,
        out_specs=vmem_spec,
    )(src2d, pos2d, wqk, bqk,
      p["wv"], p["bv"], p["wo"], p["bo"],
      p["w1"], p["b1"], p["w2"], p["b2"],
      p["g1"], p["be1"], p["g2"], p["be2"])

    return out2d.reshape(s, n, e)


# -------------------------- pure-JAX reference ----------------------------------
def reference_layer(src, pos, p):
    x = src.astype(jnp.float32)
    qk = x + pos
    q = qk @ p["wq"] + p["bq"]
    k = qk @ p["wk"] + p["bk"]
    v = x @ p["wv"] + p["bv"]
    qh = q.reshape(S, N, NHEAD, HEAD_DIM).transpose(1, 2, 0, 3)
    kh = k.reshape(S, N, NHEAD, HEAD_DIM).transpose(1, 2, 0, 3)
    vh = v.reshape(S, N, NHEAD, HEAD_DIM).transpose(1, 2, 0, 3)
    scores = jnp.einsum("nhsd,nhtd->nhst", qh, kh) / math.sqrt(HEAD_DIM)
    prob = jax.nn.softmax(scores, axis=-1)
    o = jnp.einsum("nhst,nhtd->nhsd", prob, vh)
    o = o.transpose(2, 0, 1, 3).reshape(S, N, E)
    attn = o @ p["wo"] + p["bo"]

    def ln(t, g, b):
        mu = jnp.mean(t, axis=-1, keepdims=True)
        var = jnp.mean((t - mu) ** 2, axis=-1, keepdims=True)
        return (t - mu) * jax.lax.rsqrt(var + LN_EPS) * g + b

    y = ln(x + attn, p["g1"], p["be1"])
    ff = jnp.maximum(y @ p["w1"] + p["b1"], 0.0) @ p["w2"] + p["b2"]
    return ln(y + ff, p["g2"], p["be2"])


# --------------------------------- main -----------------------------------------
if __name__ == "__main__":
    key = jax.random.PRNGKey(0)
    keys = jax.random.split(key, 16)

    # Deterministic synthetic parameters (shapes from the module's __init__).
    # Weights are stored already transposed to (in, out) so kernels do x @ W.
    params = {
        "wq": 0.1 * jax.random.normal(keys[0], (E, E), jnp.float32),
        "wk": 0.1 * jax.random.normal(keys[1], (E, E), jnp.float32),
        "wv": 0.1 * jax.random.normal(keys[2], (E, E), jnp.float32),
        "bq": 0.05 * jax.random.normal(keys[3], (1, E), jnp.float32),
        "bk": 0.05 * jax.random.normal(keys[4], (1, E), jnp.float32),
        "bv": 0.05 * jax.random.normal(keys[5], (1, E), jnp.float32),
        "wo": 0.1 * jax.random.normal(keys[6], (E, E), jnp.float32),
        "bo": 0.05 * jax.random.normal(keys[7], (1, E), jnp.float32),
        "w1": 0.1 * jax.random.normal(keys[8], (E, FF), jnp.float32),
        "b1": 0.05 * jax.random.normal(keys[9], (1, FF), jnp.float32),
        "w2": 0.1 * jax.random.normal(keys[10], (FF, E), jnp.float32),
        "b2": 0.05 * jax.random.normal(keys[11], (1, E), jnp.float32),
        "g1": jnp.ones((1, E), jnp.float32),
        "be1": jnp.zeros((1, E), jnp.float32),
        "g2": jnp.ones((1, E), jnp.float32),
        "be2": jnp.zeros((1, E), jnp.float32),
    }

    src = jax.random.normal(keys[12], (S, N, E), jnp.float32)
    pos = 0.1 * jax.random.normal(keys[13], (S, N, E), jnp.float32)

    out = transformer_encoder_layer(src, pos, params)
    out = jax.block_until_ready(out)

    ref = reference_layer(src, pos, params)
    np.testing.assert_allclose(np.asarray(out), np.asarray(ref),
                               rtol=2e-3, atol=2e-3)

    print("KERNEL_OK")
</pallas_src>

<mosaic_0001>
module attributes {stable_mosaic.version = 11 : i64} {
  func.func @encoder_layer_kernel(%arg0: memref<16x32xf32, #tpu.memory_space<vmem>>, %arg1: memref<16x32xf32, #tpu.memory_space<vmem>>, %arg2: memref<32x64xf32, #tpu.memory_space<vmem>>, %arg3: memref<1x64xf32, #tpu.memory_space<vmem>>, %arg4: memref<32x32xf32, #tpu.memory_space<vmem>>, %arg5: memref<1x32xf32, #tpu.memory_space<vmem>>, %arg6: memref<32x32xf32, #tpu.memory_space<vmem>>, %arg7: memref<1x32xf32, #tpu.memory_space<vmem>>, %arg8: memref<32x64xf32, #tpu.memory_space<vmem>>, %arg9: memref<1x64xf32, #tpu.memory_space<vmem>>, %arg10: memref<64x32xf32, #tpu.memory_space<vmem>>, %arg11: memref<1x32xf32, #tpu.memory_space<vmem>>, %arg12: memref<1x32xf32, #tpu.memory_space<vmem>>, %arg13: memref<1x32xf32, #tpu.memory_space<vmem>>, %arg14: memref<1x32xf32, #tpu.memory_space<vmem>>, %arg15: memref<1x32xf32, #tpu.memory_space<vmem>>, %arg16: memref<16x32xf32, #tpu.memory_space<vmem>>) attributes {dimension_semantics = [], scalar_prefetch = 0 : i64, scratch_operands = 0 : i64, tpu.core_type = #tpu.core_type<tc>} {
    %c0 = arith.constant 0 : index
    %c0_0 = arith.constant 0 : index
    %0 = vector.load %arg0[%c0, %c0_0] : memref<16x32xf32, #tpu.memory_space<vmem>>, vector<16x32xf32>
    %c0_1 = arith.constant 0 : index
    %c0_2 = arith.constant 0 : index
    %1 = vector.load %arg1[%c0_1, %c0_2] : memref<16x32xf32, #tpu.memory_space<vmem>>, vector<16x32xf32>
    %2 = arith.addf %0, %1 : vector<16x32xf32>
    %c0_3 = arith.constant 0 : index
    %c0_4 = arith.constant 0 : index
    %3 = vector.load %arg2[%c0_3, %c0_4] : memref<32x64xf32, #tpu.memory_space<vmem>>, vector<32x64xf32>
    %cst = arith.constant dense<0.000000e+00> : vector<16x64xf32>
    %4 = tpu.matmul %2, %3, %cst {dimension_numbers = #tpu.dot_dimension_numbers<[1], [0], [0], [1], [0, 0, 1, 1], [], []>} : vector<16x32xf32>, vector<32x64xf32>, vector<16x64xf32> -> vector<16x64xf32>
    %c0_5 = arith.constant 0 : index
    %c0_6 = arith.constant 0 : index
    %5 = vector.load %arg3[%c0_5, %c0_6] : memref<1x64xf32, #tpu.memory_space<vmem>>, vector<1x64xf32>
    %6 = vector.broadcast %5 : vector<1x64xf32> to vector<16x64xf32>
    %7 = arith.addf %4, %6 : vector<16x64xf32>
    %c0_7 = arith.constant 0 : index
    %c0_8 = arith.constant 0 : index
    %8 = vector.load %arg4[%c0_7, %c0_8] : memref<32x32xf32, #tpu.memory_space<vmem>>, vector<32x32xf32>
    %cst_9 = arith.constant dense<0.000000e+00> : vector<16x32xf32>
    %9 = tpu.matmul %0, %8, %cst_9 {dimension_numbers = #tpu.dot_dimension_numbers<[1], [0], [0], [1], [0, 0, 1, 1], [], []>} : vector<16x32xf32>, vector<32x32xf32>, vector<16x32xf32> -> vector<16x32xf32>
    %c0_10 = arith.constant 0 : index
    %c0_11 = arith.constant 0 : index
    %10 = vector.load %arg5[%c0_10, %c0_11] : memref<1x32xf32, #tpu.memory_space<vmem>>, vector<1x32xf32>
    %11 = vector.broadcast %10 : vector<1x32xf32> to vector<16x32xf32>
    %12 = arith.addf %9, %11 : vector<16x32xf32>
    %13 = tpu.iota {dimensions = array<i32: 0>} : vector<16x16xi32>
    %14 = tpu.iota {dimensions = array<i32: 1>} : vector<16x16xi32>
    %c2_i32 = arith.constant 2 : i32
    %c0_i32 = arith.constant 0 : i32
    %15 = arith.cmpi eq, %c2_i32, %c0_i32 : i32
    %c1_i32 = arith.constant 1 : i32
    %16 = arith.select %15, %c1_i32, %c2_i32 : i32
    %17 = vector.broadcast %16 : i32 to vector<16x16xi32>
    %18 = arith.remsi %13, %17 : vector<16x16xi32>
    %c0_i32_12 = arith.constant 0 : i32
    %19 = vector.broadcast %c0_i32_12 : i32 to vector<16x16xi32>
    %20 = arith.cmpi ne, %18, %19 : vector<16x16xi32>
    %c0_i32_13 = arith.constant 0 : i32
    %21 = vector.broadcast %c0_i32_13 : i32 to vector<16x16xi32>
    %22 = arith.cmpi slt, %18, %21 : vector<16x16xi32>
    %c0_i32_14 = arith.constant 0 : i32
    %23 = arith.cmpi slt, %16, %c0_i32_14 : i32
    %24 = vector.broadcast %23 : i1 to vector<16x16xi1>
    %25 = vector.broadcast %24 : vector<16x16xi1> to vector<16x16xi1>
    %26 = arith.xori %22, %25 : vector<16x16xi1>
    %27 = arith.andi %26, %20 : vector<16x16xi1>
    %28 = vector.broadcast %16 : i32 to vector<16x16xi32>
    %29 = arith.addi %18, %28 : vector<16x16xi32>
    %30 = arith.select %27, %29, %18 : vector<16x16xi1>, vector<16x16xi32>
    %c2_i32_15 = arith.constant 2 : i32
    %c0_i32_16 = arith.constant 0 : i32
    %31 = arith.cmpi eq, %c2_i32_15, %c0_i32_16 : i32
    %c1_i32_17 = arith.constant 1 : i32
    %32 = arith.select %31, %c1_i32_17, %c2_i32_15 : i32
    %33 = vector.broadcast %32 : i32 to vector<16x16xi32>
    %34 = arith.remsi %14, %33 : vector<16x16xi32>
    %c0_i32_18 = arith.constant 0 : i32
    %35 = vector.broadcast %c0_i32_18 : i32 to vector<16x16xi32>
    %36 = arith.cmpi ne, %34, %35 : vector<16x16xi32>
    %c0_i32_19 = arith.constant 0 : i32
    %37 = vector.broadcast %c0_i32_19 : i32 to vector<16x16xi32>
    %38 = arith.cmpi slt, %34, %37 : vector<16x16xi32>
    %c0_i32_20 = arith.constant 0 : i32
    %39 = arith.cmpi slt, %32, %c0_i32_20 : i32
    %40 = vector.broadcast %39 : i1 to vector<16x16xi1>
    %41 = vector.broadcast %40 : vector<16x16xi1> to vector<16x16xi1>
    %42 = arith.xori %38, %41 : vector<16x16xi1>
    %43 = arith.andi %42, %36 : vector<16x16xi1>
    %44 = vector.broadcast %32 : i32 to vector<16x16xi32>
    %45 = arith.addi %34, %44 : vector<16x16xi32>
    %46 = arith.select %43, %45, %34 : vector<16x16xi1>, vector<16x16xi32>
    %47 = arith.cmpi eq, %30, %46 : vector<16x16xi32>
    %cst_21 = arith.constant 0.000000e+00 : f32
    %cst_22 = arith.constant -1.000000e+30 : f32
    %48 = vector.broadcast %cst_21 : f32 to vector<16x16xf32>
    %49 = vector.broadcast %cst_22 : f32 to vector<16x16xf32>
    %50 = arith.select %47, %48, %49 : vector<16x16xi1>, vector<16x16xf32>
    %c0_23 = arith.constant 0 : index
    %c0_24 = arith.constant 0 : index
    %51 = vector.load %arg6[%c0_23, %c0_24] : memref<32x32xf32, #tpu.memory_space<vmem>>, vector<32x32xf32>
    %52 = vector.extract_strided_slice %7 {offsets = [0, 0], sizes = [16, 8], strides = [1, 1]} : vector<16x64xf32> to vector<16x8xf32>
    %53 = vector.extract_strided_slice %7 {offsets = [0, 32], sizes = [16, 8], strides = [1, 1]} : vector<16x64xf32> to vector<16x8xf32>
    %54 = vector.extract_strided_slice %12 {offsets = [0, 0], sizes = [16, 8], strides = [1, 1]} : vector<16x32xf32> to vector<16x8xf32>
    %cst_25 = arith.constant dense<0.000000e+00> : vector<16x16xf32>
    %55 = tpu.matmul %52, %53, %cst_25 {dimension_numbers = #tpu.dot_dimension_numbers<[1], [1], [0], [0], [0, 0, 1, 0], [], []>} : vector<16x8xf32>, vector<16x8xf32>, vector<16x16xf32> -> vector<16x16xf32>
    %56 = arith.addf %55, %50 : vector<16x16xf32>
    %cst_26 = arith.constant dense<0xFF800000> : vector<16xf32>
    %57 = vector.multi_reduction <maximumf>, %56, %cst_26 [1] : vector<16x16xf32> to vector<16xf32>
    %58 = vector.shape_cast %57 : vector<16xf32> to vector<16x1xf32>
    %59 = vector.broadcast %58 : vector<16x1xf32> to vector<16x16xf32>
    %60 = arith.subf %56, %59 : vector<16x16xf32>
    %61 = math.exp %60 : vector<16x16xf32>
    %cst_27 = arith.constant dense<0.000000e+00> : vector<16xf32>
    %62 = vector.multi_reduction <add>, %61, %cst_27 [1] : vector<16x16xf32> to vector<16xf32>
    %63 = vector.shape_cast %62 : vector<16xf32> to vector<16x1xf32>
    %cst_28 = arith.constant dense<0.000000e+00> : vector<16x8xf32>
    %64 = tpu.matmul %61, %54, %cst_28 {dimension_numbers = #tpu.dot_dimension_numbers<[1], [0], [0], [1], [0, 0, 1, 1], [], []>} : vector<16x16xf32>, vector<16x8xf32>, vector<16x8xf32> -> vector<16x8xf32>
    %65 = tpu.reciprocal %63 {approx = true} : vector<16x1xf32> -> vector<16x1xf32>
    %66 = vector.broadcast %65 : vector<16x1xf32> to vector<16x8xf32>
    %67 = arith.mulf %64, %66 : vector<16x8xf32>
    %68 = vector.extract_strided_slice %51 {offsets = [0, 0], sizes = [8, 32], strides = [1, 1]} : vector<32x32xf32> to vector<8x32xf32>
    %cst_29 = arith.constant dense<0.000000e+00> : vector<16x32xf32>
    %69 = tpu.matmul %67, %68, %cst_29 {dimension_numbers = #tpu.dot_dimension_numbers<[1], [0], [0], [1], [0, 0, 1, 1], [], []>} : vector<16x8xf32>, vector<8x32xf32>, vector<16x32xf32> -> vector<16x32xf32>
    %70 = vector.extract_strided_slice %7 {offsets = [0, 8], sizes = [16, 8], strides = [1, 1]} : vector<16x64xf32> to vector<16x8xf32>
    %71 = vector.extract_strided_slice %7 {offsets = [0, 40], sizes = [16, 8], strides = [1, 1]} : vector<16x64xf32> to vector<16x8xf32>
    %72 = vector.extract_strided_slice %12 {offsets = [0, 8], sizes = [16, 8], strides = [1, 1]} : vector<16x32xf32> to vector<16x8xf32>
    %cst_30 = arith.constant dense<0.000000e+00> : vector<16x16xf32>
    %73 = tpu.matmul %70, %71, %cst_30 {dimension_numbers = #tpu.dot_dimension_numbers<[1], [1], [0], [0], [0, 0, 1, 0], [], []>} : vector<16x8xf32>, vector<16x8xf32>, vector<16x16xf32> -> vector<16x16xf32>
    %74 = arith.addf %73, %50 : vector<16x16xf32>
    %cst_31 = arith.constant dense<0xFF800000> : vector<16xf32>
    %75 = vector.multi_reduction <maximumf>, %74, %cst_31 [1] : vector<16x16xf32> to vector<16xf32>
    %76 = vector.shape_cast %75 : vector<16xf32> to vector<16x1xf32>
    %77 = vector.broadcast %76 : vector<16x1xf32> to vector<16x16xf32>
    %78 = arith.subf %74, %77 : vector<16x16xf32>
    %79 = math.exp %78 : vector<16x16xf32>
    %cst_32 = arith.constant dense<0.000000e+00> : vector<16xf32>
    %80 = vector.multi_reduction <add>, %79, %cst_32 [1] : vector<16x16xf32> to vector<16xf32>
    %81 = vector.shape_cast %80 : vector<16xf32> to vector<16x1xf32>
    %cst_33 = arith.constant dense<0.000000e+00> : vector<16x8xf32>
    %82 = tpu.matmul %79, %72, %cst_33 {dimension_numbers = #tpu.dot_dimension_numbers<[1], [0], [0], [1], [0, 0, 1, 1], [], []>} : vector<16x16xf32>, vector<16x8xf32>, vector<16x8xf32> -> vector<16x8xf32>
    %83 = tpu.reciprocal %81 {approx = true} : vector<16x1xf32> -> vector<16x1xf32>
    %84 = vector.broadcast %83 : vector<16x1xf32> to vector<16x8xf32>
    %85 = arith.mulf %82, %84 : vector<16x8xf32>
    %86 = vector.extract_strided_slice %51 {offsets = [8, 0], sizes = [8, 32], strides = [1, 1]} : vector<32x32xf32> to vector<8x32xf32>
    %cst_34 = arith.constant dense<0.000000e+00> : vector<16x32xf32>
    %87 = tpu.matmul %85, %86, %cst_34 {dimension_numbers = #tpu.dot_dimension_numbers<[1], [0], [0], [1], [0, 0, 1, 1], [], []>} : vector<16x8xf32>, vector<8x32xf32>, vector<16x32xf32> -> vector<16x32xf32>
    %88 = arith.addf %69, %87 : vector<16x32xf32>
    %89 = vector.extract_strided_slice %7 {offsets = [0, 16], sizes = [16, 8], strides = [1, 1]} : vector<16x64xf32> to vector<16x8xf32>
    %90 = vector.extract_strided_slice %7 {offsets = [0, 48], sizes = [16, 8], strides = [1, 1]} : vector<16x64xf32> to vector<16x8xf32>
    %91 = vector.extract_strided_slice %12 {offsets = [0, 16], sizes = [16, 8], strides = [1, 1]} : vector<16x32xf32> to vector<16x8xf32>
    %cst_35 = arith.constant dense<0.000000e+00> : vector<16x16xf32>
    %92 = tpu.matmul %89, %90, %cst_35 {dimension_numbers = #tpu.dot_dimension_numbers<[1], [1], [0], [0], [0, 0, 1, 0], [], []>} : vector<16x8xf32>, vector<16x8xf32>, vector<16x16xf32> -> vector<16x16xf32>
    %93 = arith.addf %92, %50 : vector<16x16xf32>
    %cst_36 = arith.constant dense<0xFF800000> : vector<16xf32>
    %94 = vector.multi_reduction <maximumf>, %93, %cst_36 [1] : vector<16x16xf32> to vector<16xf32>
    %95 = vector.shape_cast %94 : vector<16xf32> to vector<16x1xf32>
    %96 = vector.broadcast %95 : vector<16x1xf32> to vector<16x16xf32>
    %97 = arith.subf %93, %96 : vector<16x16xf32>
    %98 = math.exp %97 : vector<16x16xf32>
    %cst_37 = arith.constant dense<0.000000e+00> : vector<16xf32>
    %99 = vector.multi_reduction <add>, %98, %cst_37 [1] : vector<16x16xf32> to vector<16xf32>
    %100 = vector.shape_cast %99 : vector<16xf32> to vector<16x1xf32>
    %cst_38 = arith.constant dense<0.000000e+00> : vector<16x8xf32>
    %101 = tpu.matmul %98, %91, %cst_38 {dimension_numbers = #tpu.dot_dimension_numbers<[1], [0], [0], [1], [0, 0, 1, 1], [], []>} : vector<16x16xf32>, vector<16x8xf32>, vector<16x8xf32> -> vector<16x8xf32>
    %102 = tpu.reciprocal %100 {approx = true} : vector<16x1xf32> -> vector<16x1xf32>
    %103 = vector.broadcast %102 : vector<16x1xf32> to vector<16x8xf32>
    %104 = arith.mulf %101, %103 : vector<16x8xf32>
    %105 = vector.extract_strided_slice %51 {offsets = [16, 0], sizes = [8, 32], strides = [1, 1]} : vector<32x32xf32> to vector<8x32xf32>
    %cst_39 = arith.constant dense<0.000000e+00> : vector<16x32xf32>
    %106 = tpu.matmul %104, %105, %cst_39 {dimension_numbers = #tpu.dot_dimension_numbers<[1], [0], [0], [1], [0, 0, 1, 1], [], []>} : vector<16x8xf32>, vector<8x32xf32>, vector<16x32xf32> -> vector<16x32xf32>
    %107 = arith.addf %88, %106 : vector<16x32xf32>
    %108 = vector.extract_strided_slice %7 {offsets = [0, 24], sizes = [16, 8], strides = [1, 1]} : vector<16x64xf32> to vector<16x8xf32>
    %109 = vector.extract_strided_slice %7 {offsets = [0, 56], sizes = [16, 8], strides = [1, 1]} : vector<16x64xf32> to vector<16x8xf32>
    %110 = vector.extract_strided_slice %12 {offsets = [0, 24], sizes = [16, 8], strides = [1, 1]} : vector<16x32xf32> to vector<16x8xf32>
    %cst_40 = arith.constant dense<0.000000e+00> : vector<16x16xf32>
    %111 = tpu.matmul %108, %109, %cst_40 {dimension_numbers = #tpu.dot_dimension_numbers<[1], [1], [0], [0], [0, 0, 1, 0], [], []>} : vector<16x8xf32>, vector<16x8xf32>, vector<16x16xf32> -> vector<16x16xf32>
    %112 = arith.addf %111, %50 : vector<16x16xf32>
    %cst_41 = arith.constant dense<0xFF800000> : vector<16xf32>
    %113 = vector.multi_reduction <maximumf>, %112, %cst_41 [1] : vector<16x16xf32> to vector<16xf32>
    %114 = vector.shape_cast %113 : vector<16xf32> to vector<16x1xf32>
    %115 = vector.broadcast %114 : vector<16x1xf32> to vector<16x16xf32>
    %116 = arith.subf %112, %115 : vector<16x16xf32>
    %117 = math.exp %116 : vector<16x16xf32>
    %cst_42 = arith.constant dense<0.000000e+00> : vector<16xf32>
    %118 = vector.multi_reduction <add>, %117, %cst_42 [1] : vector<16x16xf32> to vector<16xf32>
    %119 = vector.shape_cast %118 : vector<16xf32> to vector<16x1xf32>
    %cst_43 = arith.constant dense<0.000000e+00> : vector<16x8xf32>
    %120 = tpu.matmul %117, %110, %cst_43 {dimension_numbers = #tpu.dot_dimension_numbers<[1], [0], [0], [1], [0, 0, 1, 1], [], []>} : vector<16x16xf32>, vector<16x8xf32>, vector<16x8xf32> -> vector<16x8xf32>
    %121 = tpu.reciprocal %119 {approx = true} : vector<16x1xf32> -> vector<16x1xf32>
    %122 = vector.broadcast %121 : vector<16x1xf32> to vector<16x8xf32>
    %123 = arith.mulf %120, %122 : vector<16x8xf32>
    %124 = vector.extract_strided_slice %51 {offsets = [24, 0], sizes = [8, 32], strides = [1, 1]} : vector<32x32xf32> to vector<8x32xf32>
    %cst_44 = arith.constant dense<0.000000e+00> : vector<16x32xf32>
    %125 = tpu.matmul %123, %124, %cst_44 {dimension_numbers = #tpu.dot_dimension_numbers<[1], [0], [0], [1], [0, 0, 1, 1], [], []>} : vector<16x8xf32>, vector<8x32xf32>, vector<16x32xf32> -> vector<16x32xf32>
    %126 = arith.addf %107, %125 : vector<16x32xf32>
    %c0_45 = arith.constant 0 : index
    %c0_46 = arith.constant 0 : index
    %127 = vector.load %arg7[%c0_45, %c0_46] : memref<1x32xf32, #tpu.memory_space<vmem>>, vector<1x32xf32>
    %128 = vector.broadcast %127 : vector<1x32xf32> to vector<16x32xf32>
    %129 = arith.addf %126, %128 : vector<16x32xf32>
    %130 = arith.addf %0, %129 : vector<16x32xf32>
    %cst_47 = arith.constant dense<0.000000e+00> : vector<16xf32>
    %131 = vector.multi_reduction <add>, %130, %cst_47 [1] : vector<16x32xf32> to vector<16xf32>
    %132 = vector.shape_cast %131 : vector<16xf32> to vector<16x1xf32>
    %cst_48 = arith.constant 3.200000e+01 : f32
    %133 = vector.broadcast %cst_48 : f32 to vector<16x1xf32>
    %134 = arith.divf %132, %133 : vector<16x1xf32>
    %135 = vector.broadcast %134 : vector<16x1xf32> to vector<16x32xf32>
    %136 = arith.subf %130, %135 : vector<16x32xf32>
    %137 = arith.mulf %136, %136 : vector<16x32xf32>
    %cst_49 = arith.constant dense<0.000000e+00> : vector<16xf32>
    %138 = vector.multi_reduction <add>, %137, %cst_49 [1] : vector<16x32xf32> to vector<16xf32>
    %139 = vector.shape_cast %138 : vector<16xf32> to vector<16x1xf32>
    %cst_50 = arith.constant 3.200000e+01 : f32
    %140 = vector.broadcast %cst_50 : f32 to vector<16x1xf32>
    %141 = arith.divf %139, %140 : vector<16x1xf32>
    %142 = vector.broadcast %134 : vector<16x1xf32> to vector<16x32xf32>
    %143 = arith.subf %130, %142 : vector<16x32xf32>
    %cst_51 = arith.constant 9.99999974E-6 : f32
    %144 = vector.broadcast %cst_51 : f32 to vector<16x1xf32>
    %145 = arith.addf %141, %144 : vector<16x1xf32>
    %146 = math.rsqrt %145 : vector<16x1xf32>
    %147 = vector.broadcast %146 : vector<16x1xf32> to vector<16x32xf32>
    %148 = arith.mulf %143, %147 : vector<16x32xf32>
    %c0_52 = arith.constant 0 : index
    %c0_53 = arith.constant 0 : index
    %149 = vector.load %arg12[%c0_52, %c0_53] : memref<1x32xf32, #tpu.memory_space<vmem>>, vector<1x32xf32>
    %150 = vector.broadcast %149 : vector<1x32xf32> to vector<16x32xf32>
    %151 = arith.mulf %148, %150 : vector<16x32xf32>
    %c0_54 = arith.constant 0 : index
    %c0_55 = arith.constant 0 : index
    %152 = vector.load %arg13[%c0_54, %c0_55] : memref<1x32xf32, #tpu.memory_space<vmem>>, vector<1x32xf32>
    %153 = vector.broadcast %152 : vector<1x32xf32> to vector<16x32xf32>
    %154 = arith.addf %151, %153 : vector<16x32xf32>
    %c0_56 = arith.constant 0 : index
    %c0_57 = arith.constant 0 : index
    %155 = vector.load %arg8[%c0_56, %c0_57] : memref<32x64xf32, #tpu.memory_space<vmem>>, vector<32x64xf32>
    %cst_58 = arith.constant dense<0.000000e+00> : vector<16x64xf32>
    %156 = tpu.matmul %154, %155, %cst_58 {dimension_numbers = #tpu.dot_dimension_numbers<[1], [0], [0], [1], [0, 0, 1, 1], [], []>} : vector<16x32xf32>, vector<32x64xf32>, vector<16x64xf32> -> vector<16x64xf32>
    %c0_59 = arith.constant 0 : index
    %c0_60 = arith.constant 0 : index
    %157 = vector.load %arg9[%c0_59, %c0_60] : memref<1x64xf32, #tpu.memory_space<vmem>>, vector<1x64xf32>
    %158 = vector.broadcast %157 : vector<1x64xf32> to vector<16x64xf32>
    %159 = arith.addf %156, %158 : vector<16x64xf32>
    %cst_61 = arith.constant 0.000000e+00 : f32
    %160 = vector.broadcast %cst_61 : f32 to vector<16x64xf32>
    %161 = arith.maximumf %159, %160 : vector<16x64xf32>
    %c0_62 = arith.constant 0 : index
    %c0_63 = arith.constant 0 : index
    %162 = vector.load %arg10[%c0_62, %c0_63] : memref<64x32xf32, #tpu.memory_space<vmem>>, vector<64x32xf32>
    %cst_64 = arith.constant dense<0.000000e+00> : vector<16x32xf32>
    %163 = tpu.matmul %161, %162, %cst_64 {dimension_numbers = #tpu.dot_dimension_numbers<[1], [0], [0], [1], [0, 0, 1, 1], [], []>} : vector<16x64xf32>, vector<64x32xf32>, vector<16x32xf32> -> vector<16x32xf32>
    %c0_65 = arith.constant 0 : index
    %c0_66 = arith.constant 0 : index
    %164 = vector.load %arg11[%c0_65, %c0_66] : memref<1x32xf32, #tpu.memory_space<vmem>>, vector<1x32xf32>
    %165 = vector.broadcast %164 : vector<1x32xf32> to vector<16x32xf32>
    %166 = arith.addf %163, %165 : vector<16x32xf32>
    %167 = arith.addf %154, %166 : vector<16x32xf32>
    %cst_67 = arith.constant dense<0.000000e+00> : vector<16xf32>
    %168 = vector.multi_reduction <add>, %167, %cst_67 [1] : vector<16x32xf32> to vector<16xf32>
    %169 = vector.shape_cast %168 : vector<16xf32> to vector<16x1xf32>
    %cst_68 = arith.constant 3.200000e+01 : f32
    %170 = vector.broadcast %cst_68 : f32 to vector<16x1xf32>
    %171 = arith.divf %169, %170 : vector<16x1xf32>
    %172 = vector.broadcast %171 : vector<16x1xf32> to vector<16x32xf32>
    %173 = arith.subf %167, %172 : vector<16x32xf32>
    %174 = arith.mulf %173, %173 : vector<16x32xf32>
    %cst_69 = arith.constant dense<0.000000e+00> : vector<16xf32>
    %175 = vector.multi_reduction <add>, %174, %cst_69 [1] : vector<16x32xf32> to vector<16xf32>
    %176 = vector.shape_cast %175 : vector<16xf32> to vector<16x1xf32>
    %cst_70 = arith.constant 3.200000e+01 : f32
    %177 = vector.broadcast %cst_70 : f32 to vector<16x1xf32>
    %178 = arith.divf %176, %177 : vector<16x1xf32>
    %179 = vector.broadcast %171 : vector<16x1xf32> to vector<16x32xf32>
    %180 = arith.subf %167, %179 : vector<16x32xf32>
    %cst_71 = arith.constant 9.99999974E-6 : f32
    %181 = vector.broadcast %cst_71 : f32 to vector<16x1xf32>
    %182 = arith.addf %178, %181 : vector<16x1xf32>
    %183 = math.rsqrt %182 : vector<16x1xf32>
    %184 = vector.broadcast %183 : vector<16x1xf32> to vector<16x32xf32>
    %185 = arith.mulf %180, %184 : vector<16x32xf32>
    %c0_72 = arith.constant 0 : index
    %c0_73 = arith.constant 0 : index
    %186 = vector.load %arg14[%c0_72, %c0_73] : memref<1x32xf32, #tpu.memory_space<vmem>>, vector<1x32xf32>
    %187 = vector.broadcast %186 : vector<1x32xf32> to vector<16x32xf32>
    %188 = arith.mulf %185, %187 : vector<16x32xf32>
    %c0_74 = arith.constant 0 : index
    %c0_75 = arith.constant 0 : index
    %189 = vector.load %arg15[%c0_74, %c0_75] : memref<1x32xf32, #tpu.memory_space<vmem>>, vector<1x32xf32>
    %190 = vector.broadcast %189 : vector<1x32xf32> to vector<16x32xf32>
    %191 = arith.addf %188, %190 : vector<16x32xf32>
    %c0_76 = arith.constant 0 : index
    %c0_77 = arith.constant 0 : index
    %192 = vector.load %arg16[%c0_76, %c0_77] : memref<16x32xf32, #tpu.memory_space<vmem>>, vector<16x32xf32>
    tpu.vector_store %arg16[%c0_76, %c0_77], %191 {strides = array<i32>} : memref<16x32xf32, #tpu.memory_space<vmem>>, vector<16x32xf32>,
    return
  }
}

</mosaic_0001>

<llo_original>
// kernel: tpu_custom_call.1
$region0: #{tpu_custom_call.1}
  #allocation0 [shape = 'u32[]', space=smem, size = 0x4, offset = 0x4, fixed_abs, tag = 'smem constant byte address 0x4 - core index']
  #allocation1 [shape = 'u32[72,128]{1,0:T(1,128)}', space=vmem, size = 0x9000, scoped, tag = 'internal scratch']
  %s0 = inlined_call_operand.hbm [shape: f32[16,32], index: 0, kind: input, shape index: {}]
  %s1 = inlined_call_operand.hbm [shape: f32[16,32], index: 1, kind: input, shape index: {}]
  %s2 = inlined_call_operand.vmem [shape: f32[32,64], index: 2, kind: input, shape index: {}]
  %s3 = inlined_call_operand.vmem [shape: f32[1,64], index: 3, kind: input, shape index: {}]
  %s4 = inlined_call_operand.vmem [shape: f32[32,32], index: 4, kind: input, shape index: {}]
  %s5 = inlined_call_operand.vmem [shape: f32[1,32], index: 5, kind: input, shape index: {}]
  %s6 = inlined_call_operand.vmem [shape: f32[32,32], index: 6, kind: input, shape index: {}]
  %s7 = inlined_call_operand.vmem [shape: f32[1,32], index: 7, kind: input, shape index: {}]
  %s8 = inlined_call_operand.hbm [shape: f32[32,64], index: 8, kind: input, shape index: {}]
  %s9 = inlined_call_operand.vmem [shape: f32[1,64], index: 9, kind: input, shape index: {}]
  %s10 = inlined_call_operand.vmem [shape: f32[64,32], index: 10, kind: input, shape index: {}]
  %s11 = inlined_call_operand.vmem [shape: f32[1,32], index: 11, kind: input, shape index: {}]
  %s12 = inlined_call_operand.vmem [shape: f32[1,32], index: 12, kind: input, shape index: {}]
  %s13 = inlined_call_operand.vmem [shape: f32[1,32], index: 13, kind: input, shape index: {}]
  %s14 = inlined_call_operand.vmem [shape: f32[1,32], index: 14, kind: input, shape index: {}]
  %s15 = inlined_call_operand.vmem [shape: f32[1,32], index: 15, kind: input, shape index: {}]
  %s16 = inlined_call_operand.hbm [shape: f32[16,32], index: 16, kind: output, shape index: {}]
  %s17 = sld [smem:[#allocation0]]
  $region86: #{tpu_custom_call.1} parent=0
    _
  %s19 = ssub.s32 1, %s17
  %s20 = scalar_select 0, %s19, %s17
  $region1: #{tpu_custom_call.1} parent=0
    #allocation2 [shape = 'u8[8192]{0}', space=vmem, size = 0x2000, scoped, tag = 'input window, operand 0, single buffered']
    #allocation3 [shape = 's32[1]{0}', space=sflag, size = 0x4, scoped, tag = 'scoped memory for tpu_custom_call.1']
    #allocation4 [shape = 's32[1]{0}', space=sflag, size = 0x4, scoped, tag = 'scoped memory for tpu_custom_call.1']
    #allocation5 [shape = 'u8[8192]{0}', space=vmem, size = 0x2000, scoped, tag = 'input window, operand 1, single buffered']
    #allocation6 [shape = 's32[1]{0}', space=sflag, size = 0x4, scoped, tag = 'scoped memory for tpu_custom_call.1']
    #allocation7 [shape = 'u8[16384]{0}', space=vmem, size = 0x4000, scoped, tag = 'input window, operand 8, single buffered']
    #allocation8 [shape = 'u8[8192]{0}', space=vmem, size = 0x2000, scoped, tag = 'output window, operand 0, single buffered']
    %21 = vsyncpa [#allocation3], 0
    %22 = vsyncpa [#allocation6], 0
    %23 = vsyncpa [#allocation4], 0
    // Predicated region
    $region2: #{tpu_custom_call.1} parent=1 // pred_check
      _
    $region3: #{tpu_custom_call.1} parent=1 // pred_check_branch
      %25 = sbr.rel (0) target = $region5
    $region4: #{tpu_custom_call.1} parent=1 // pred_region
      %27 = vsyncadd [#allocation3], 0
      %s28 = sshll.u32 %s0, 4
      %s29 = int_to_ptr.hbm [resolvable:$true] %s28
      %s30 = sshll.u32 [#allocation2], 4
      %s31 = int_to_ptr.vmem [resolvable:$true] %s30
      %36 = dma.hbm_to_vmem [thread:$0]  %s29, 256, %s31, [#allocation3], 128, 128, 8
    $region5: #{tpu_custom_call.1} parent=1 // pred_fallthru
      _
    // Predicated region
    $region6: #{tpu_custom_call.1} parent=1 // pred_check
      _
    $region7: #{tpu_custom_call.1} parent=1 // pred_check_branch
      %38 = sbr.rel (0) target = $region9
    $region8: #{tpu_custom_call.1} parent=1 // pred_region
      %40 = vsyncadd [#allocation6], 0
      %s41 = sshll.u32 %s1, 4
      %s42 = int_to_ptr.hbm [resolvable:$true] %s41
      %s43 = sshll.u32 [#allocation5], 4
      %s44 = int_to_ptr.vmem [resolvable:$true] %s43
      %49 = dma.hbm_to_vmem [thread:$0]  %s42, 256, %s44, [#allocation6], 128, 128, 8
    $region9: #{tpu_custom_call.1} parent=1 // pred_fallthru
      _
    // Predicated region
    $region10: #{tpu_custom_call.1} parent=1 // pred_check
      _
    $region11: #{tpu_custom_call.1} parent=1 // pred_check_branch
      %51 = sbr.rel (0) target = $region13
    $region12: #{tpu_custom_call.1} parent=1 // pred_region
      _
    $region13: #{tpu_custom_call.1} parent=1 // pred_fallthru
      _
    // Predicated region
    $region14: #{tpu_custom_call.1} parent=1 // pred_check
      _
    $region15: #{tpu_custom_call.1} parent=1 // pred_check_branch
      %53 = sbr.rel (0) target = $region17
    $region16: #{tpu_custom_call.1} parent=1 // pred_region
      _
    $region17: #{tpu_custom_call.1} parent=1 // pred_fallthru
      _
    // Predicated region
    $region18: #{tpu_custom_call.1} parent=1 // pred_check
      _
    $region19: #{tpu_custom_call.1} parent=1 // pred_check_branch
      %55 = sbr.rel (0) target = $region21
    $region20: #{tpu_custom_call.1} parent=1 // pred_region
      _
    $region21: #{tpu_custom_call.1} parent=1 // pred_fallthru
      _
    // Predicated region
    $region22: #{tpu_custom_call.1} parent=1 // pred_check
      _
    $region23: #{tpu_custom_call.1} parent=1 // pred_check_branch
      %57 = sbr.rel (0) target = $region25
    $region24: #{tpu_custom_call.1} parent=1 // pred_region
      _
    $region25: #{tpu_custom_call.1} parent=1 // pred_fallthru
      _
    // Predicated region
    $region26: #{tpu_custom_call.1} parent=1 // pred_check
      _
    $region27: #{tpu_custom_call.1} parent=1 // pred_check_branch
      %59 = sbr.rel (0) target = $region29
    $region28: #{tpu_custom_call.1} parent=1 // pred_region
      _
    $region29: #{tpu_custom_call.1} parent=1 // pred_fallthru
      _
    // Predicated region
    $region30: #{tpu_custom_call.1} parent=1 // pred_check
      _
    $region31: #{tpu_custom_call.1} parent=1 // pred_check_branch
      %61 = sbr.rel (0) target = $region33
    $region32: #{tpu_custom_call.1} parent=1 // pred_region
      _
    $region33: #{tpu_custom_call.1} parent=1 // pred_fallthru
      _
    // Predicated region
    $region34: #{tpu_custom_call.1} parent=1 // pred_check
      _
    $region35: #{tpu_custom_call.1} parent=1 // pred_check_branch
      %63 = sbr.rel (0) target = $region37
    $region36: #{tpu_custom_call.1} parent=1 // pred_region
      %65 = vsyncadd [#allocation6], 0
      %s66 = sshll.u32 %s8, 4
      %s67 = int_to_ptr.hbm [resolvable:$true] %s66
      %s68 = sshll.u32 [#allocation7], 4
      %s69 = int_to_ptr.vmem [resolvable:$true] %s68
      %74 = dma.hbm_to_vmem [thread:$0]  %s67, 512, %s69, [#allocation6], 128, 128, 8
    $region37: #{tpu_custom_call.1} parent=1 // pred_fallthru
      _
    // Predicated region
    $region38: #{tpu_custom_call.1} parent=1 // pred_check
      _
    $region39: #{tpu_custom_call.1} parent=1 // pred_check_branch
      %76 = sbr.rel (0) target = $region41
    $region40: #{tpu_custom_call.1} parent=1 // pred_region
      _
    $region41: #{tpu_custom_call.1} parent=1 // pred_fallthru
      _
    // Predicated region
    $region42: #{tpu_custom_call.1} parent=1 // pred_check
      _
    $region43: #{tpu_custom_call.1} parent=1 // pred_check_branch
      %78 = sbr.rel (0) target = $region45
    $region44: #{tpu_custom_call.1} parent=1 // pred_region
      _
    $region45: #{tpu_custom_call.1} parent=1 // pred_fallthru
      _
    // Predicated region
    $region46: #{tpu_custom_call.1} parent=1 // pred_check
      _
    $region47: #{tpu_custom_call.1} parent=1 // pred_check_branch
      %80 = sbr.rel (0) target = $region49
    $region48: #{tpu_custom_call.1} parent=1 // pred_region
      _
    $region49: #{tpu_custom_call.1} parent=1 // pred_fallthru
      _
    // Predicated region
    $region50: #{tpu_custom_call.1} parent=1 // pred_check
      _
    $region51: #{tpu_custom_call.1} parent=1 // pred_check_branch
      %82 = sbr.rel (0) target = $region53
    $region52: #{tpu_custom_call.1} parent=1 // pred_region
      _
    $region53: #{tpu_custom_call.1} parent=1 // pred_fallthru
      _
    // Predicated region
    $region54: #{tpu_custom_call.1} parent=1 // pred_check
      _
    $region55: #{tpu_custom_call.1} parent=1 // pred_check_branch
      %84 = sbr.rel (0) target = $region57
    $region56: #{tpu_custom_call.1} parent=1 // pred_region
      _
    $region57: #{tpu_custom_call.1} parent=1 // pred_fallthru
      _
    // Predicated region
    $region58: #{tpu_custom_call.1} parent=1 // pred_check
      _
    $region59: #{tpu_custom_call.1} parent=1 // pred_check_branch
      %86 = sbr.rel (0) target = $region61
    $region60: #{tpu_custom_call.1} parent=1 // pred_region
      _
    $region61: #{tpu_custom_call.1} parent=1 // pred_fallthru
      _
    // Predicated region
    $region62: #{tpu_custom_call.1} parent=1 // pred_check
      _
    $region63: #{tpu_custom_call.1} parent=1 // pred_check_branch
      %88 = sbr.rel (0) target = $region65
    $region64: #{tpu_custom_call.1} parent=1 // pred_region
      _
    $region65: #{tpu_custom_call.1} parent=1 // pred_fallthru
      _
    // Predicated region
    $region66: #{tpu_custom_call.1} parent=1 // pred_check
      _
    $region67: #{tpu_custom_call.1} parent=1 // pred_check_branch
      %90 = sbr.rel (0) target = $region69
    $region68: #{tpu_custom_call.1} parent=1 // pred_region
      %92 = dma.done [#allocation3], 256
    $region69: #{tpu_custom_call.1} parent=1 // pred_fallthru
      _
    // Predicated region
    $region70: #{tpu_custom_call.1} parent=1 // pred_check
      _
    $region71: #{tpu_custom_call.1} parent=1 // pred_check_branch
      %94 = sbr.rel (0) target = $region73
    $region72: #{tpu_custom_call.1} parent=1 // pred_region
      %96 = dma.done [#allocation6], 256
    $region73: #{tpu_custom_call.1} parent=1 // pred_fallthru
      _
    // Predicated region
    $region74: #{tpu_custom_call.1} parent=1 // pred_check
      _
    $region75: #{tpu_custom_call.1} parent=1 // pred_check_branch
      %98 = sbr.rel (0) target = $region77
    $region76: #{tpu_custom_call.1} parent=1 // pred_region
      %100 = dma.done [#allocation6], 512
    $region77: #{tpu_custom_call.1} parent=1 // pred_fallthru
      _
    %v101 = vld [vmem:[#allocation2] sm:$0xff]
    %v102 = vld [vmem:[#allocation2 + $0x8] sm:$0xff]
    %v103 = vld [vmem:[#allocation5] sm:$0xff]
    %v104 = vld [vmem:[#allocation5 + $0x8] sm:$0xff]
    %v105 = vadd.f32 %v101, %v103
    %v106 = vadd.f32 %v102, %v104
    %v107 = vld [vmem:[%s2] sm:$0xff]
    %v108 = vld [vmem:[%s2 + $0x8] sm:$0xff]
    %v109 = vld [vmem:[%s2 + $0x10] sm:$0xff]
    %v110 = vld [vmem:[%s2 + $0x18] sm:$0xff]
    %v111 = vld [vmem:[%s3] sm:$0x1]
    %v113 = vperm.slane %v111, 0
    %vm115 = vcmask 261120
    %v117 = vsel %vm115, %v105, 0
    %v120 = vsel %vm115, %v106, 0
    %122 = vmatpush.msra.mxu0 0.0
    %123 = vmatpush.msra.mxu0 0.0
    %124 = vmatpush.msra.mxu0 0.0
    %125 = vmatpush.msra.mxu0 0.0
    %126 = vmatpush.msra.mxu0 0.0
    %127 = vmatpush.msra.mxu0 0.0
    %128 = vmatpush.msra.mxu0 0.0
    %129 = vmatpush.msra.mxu0 0.0
    %130 = vmatpush.msra.mxu0 0.0
    %131 = vmatpush.msra.mxu0 0.0
    %132 = vmatpush.msra.mxu0 0.0
    %133 = vmatpush.msra.mxu0 0.0
    %134 = vmatpush.msra.mxu0 %v110
    %135 = vmatpush.msra.mxu0 %v109
    %136 = vmatpush.msra.mxu0 %v108
    %137 = vmatpush.msra.mxu0 %v107
    %138 = vmatmul.f32.gmra.mxu0 %v117
    %v139 = vpop.f32.mrf.mxu0
    %v140 = vadd.f32 %v113, %v139
    %141 = vmatmul.f32.gmra.mxu0 %v120
    %v142 = vpop.f32.mrf.mxu0
    %v143 = vadd.f32 %v113, %v142
    %144 = vdwg.mxu0
    %v145 = vld [vmem:[%s4] sm:$0xff]
    %v146 = vld [vmem:[%s4 + $0x8] sm:$0xff]
    %v147 = vld [vmem:[%s4 + $0x10] sm:$0xff]
    %v148 = vld [vmem:[%s4 + $0x18] sm:$0xff]
    %v149 = vld [vmem:[%s5] sm:$0x1]
    %v151 = vperm.slane %v149, 0
    %v154 = vsel %vm115, %v101, 0
    %v157 = vsel %vm115, %v102, 0
    %159 = vmatpush.msra.mxu0 0.0
    %160 = vmatpush.msra.mxu0 0.0
    %161 = vmatpush.msra.mxu0 0.0
    %162 = vmatpush.msra.mxu0 0.0
    %163 = vmatpush.msra.mxu0 0.0
    %164 = vmatpush.msra.mxu0 0.0
    %165 = vmatpush.msra.mxu0 0.0
    %166 = vmatpush.msra.mxu0 0.0
    %167 = vmatpush.msra.mxu0 0.0
    %168 = vmatpush.msra.mxu0 0.0
    %169 = vmatpush.msra.mxu0 0.0
    %170 = vmatpush.msra.mxu0 0.0
    %171 = vmatpush.msra.mxu0 %v148
    %172 = vmatpush.msra.mxu0 %v147
    %173 = vmatpush.msra.mxu0 %v146
    %174 = vmatpush.msra.mxu0 %v145
    %175 = vmatmul.f32.gmra.mxu0 %v154
    %v176 = vpop.f32.mrf.mxu0
    %v177 = vadd.f32 %v151, %v176
    %178 = vmatmul.f32.gmra.mxu0 %v157
    %v179 = vpop.f32.mrf.mxu0
    %v180 = vadd.f32 %v151, %v179
    %181 = vdwg.mxu0
    %v182 = vlaneseq
    %v183 = vshrl.u32 %v182, 7
    %v184 = vadd.s32 %v183, 8
    %v185 = vlaneseq
    %v186 = vand.u32 %v185, 127
    %vm187 = vcmp.lt.s32.totalorder %v183, 0
    %v188 = vsub.s32 0, %v183
    %v189 = vsel %vm187, %v188, %v183
    %v190 = vshrl.u32 %v189, 1
    %v191 = vand.u32 %v189, 1
    %v192 = vsub.s32 0, %v191
    %v193 = vsel %vm187, %v192, %v191
    %vm194 = vcmp.lt.s32.totalorder %v184, 0
    %v195 = vsub.s32 0, %v184
    %v196 = vsel %vm194, %v195, %v184
    %v197 = vshrl.u32 %v196, 1
    %v198 = vand.u32 %v196, 1
    %v199 = vsub.s32 0, %v198
    %v200 = vsel %vm194, %v199, %v198
    %vm201 = vcmp.ne.s32.totalorder %v193, 0
    %vm202 = vcmp.ne.s32.totalorder %v200, 0
    %vm203 = vcmp.lt.s32.totalorder %v193, 0
    %vm204 = vcmp.lt.s32.totalorder %v200, 0
    %vm205 = vmand %vm203, %vm201
    %vm206 = vmand %vm204, %vm202
    %v207 = vadd.s32 %v193, 2
    %v208 = vadd.s32 %v200, 2
    %v209 = vsel %vm205, %v207, %v193
    %v210 = vsel %vm206, %v208, %v200
    %vm211 = vcmp.lt.s32.totalorder %v186, 0
    %v212 = vsub.s32 0, %v186
    %v213 = vsel %vm211, %v212, %v186
    %v214 = vshrl.u32 %v213, 1
    %v215 = vand.u32 %v213, 1
    %v216 = vsub.s32 0, %v215
    %v217 = vsel %vm211, %v216, %v215
    %vm218 = vcmp.ne.s32.totalorder %v217, 0
    %vm219 = vcmp.lt.s32.totalorder %v217, 0
    %vm220 = vmand %vm219, %vm218
    %v221 = vadd.s32 %v217, 2
    %v222 = vsel %vm220, %v221, %v217
    %vm223 = vcmp.eq.s32.totalorder %v209, %v222
    %vm224 = vcmp.eq.s32.totalorder %v210, %v222
    %v225 = vsel %vm223, 0.0, -1e+30
    %v226 = vsel %vm224, 0.0, -1e+30
    %v227 = vld [vmem:[%s6] sm:$0xff]
    %v228 = vld [vmem:[%s6 + $0x8] sm:$0xff]
    %v229 = vld [vmem:[%s6 + $0x10] sm:$0xff]
    %v230 = vld [vmem:[%s6 + $0x18] sm:$0xff]
    %233 = vrot.lane.b32.xlu0 %v140, 96
    %v234 = vpop.permute.xlu0 %233
    %235 = vrot.lane.b32.xlu0 %v143, 96
    %v236 = vpop.permute.xlu0 %235
    %vm237 = vcmask 64512
    %v238 = vsel %vm237, %v140, 0
    %v240 = vsel %vm237, %v143, 0
    %v242 = vsel %vm237, %v234, 0
    %v244 = vsel %vm237, %v236, 0
    %246 = vmatpush.xpose.msra.mxu0 0.0
    %247 = vmatpush.xpose.msra.mxu0 0.0
    %248 = vmatpush.xpose.msra.mxu0 0.0
    %249 = vmatpush.xpose.msra.mxu0 0.0
    %250 = vmatpush.xpose.msra.mxu0 0.0
    %251 = vmatpush.xpose.msra.mxu0 0.0
    %252 = vmatpush.xpose.msra.mxu0 0.0
    %253 = vmatpush.xpose.msra.mxu0 0.0
    %254 = vmatpush.xpose.msra.mxu0 0.0
    %255 = vmatpush.xpose.msra.mxu0 0.0
    %256 = vmatpush.xpose.msra.mxu0 0.0
    %257 = vmatpush.xpose.msra.mxu0 0.0
    %258 = vmatpush.xpose.msra.mxu0 0.0
    %259 = vmatpush.xpose.msra.mxu0 0.0
    %260 = vmatpush.xpose.msra.mxu0 %v244
    %261 = vmatpush.xpose.msra.mxu0 %v242
    %262 = vmatmul.f32.gmra.mxu0 %v238
    %v263 = vpop.f32.mrf.mxu0
    %v264 = vadd.f32 %v225, %v263
    %265 = vmatmul.f32.gmra.mxu0 %v240
    %v266 = vpop.f32.mrf.mxu0
    %v267 = vadd.f32 %v226, %v266
    %268 = vdwg.mxu0
    %vm269 = vcmask 130048
    %v270 = vsel %vm269, %v264, -inf
    %271 = vmax.xlane.f32.xlu0 %v270
    %v272 = vpop.xlane.xlu0 %271
    %v273 = vsel %vm269, %v267, -inf
    %274 = vmax.xlane.f32.xlu0 %v273
    %v275 = vpop.xlane.xlu0 %274
    %v276 = vsub.f32 %v264, %v272
    %v277 = vsub.f32 %v267, %v275
    %v278 = vmul.f32 %v276, 1.442695
    %v279 = vpow.pop %v278
    %v280 = vmul.f32 %v277, 1.442695
    %v281 = vpow.pop %v280
    %v282 = vsel %vm269, %v279, 0.0
    %283 = vadd.xlane.f32.xlu0 %v282
    %v284 = vpop.xlane.xlu0 %283
    %v285 = vsel %vm269, %v281, 0.0
    %286 = vadd.xlane.f32.xlu0 %v285
    %v287 = vpop.xlane.xlu0 %286
    %v289 = vsel %vm269, %v279, 0
    %v292 = vsel %vm269, %v281, 0
    %294 = vmatpush.msra.mxu0 0.0
    %295 = vmatpush.msra.mxu0 0.0
    %296 = vmatpush.msra.mxu0 0.0
    %297 = vmatpush.msra.mxu0 0.0
    %298 = vmatpush.msra.mxu0 0.0
    %299 = vmatpush.msra.mxu0 0.0
    %300 = vmatpush.msra.mxu0 0.0
    %301 = vmatpush.msra.mxu0 0.0
    %302 = vmatpush.msra.mxu0 0.0
    %303 = vmatpush.msra.mxu0 0.0
    %304 = vmatpush.msra.mxu0 0.0
    %305 = vmatpush.msra.mxu0 0.0
    %306 = vmatpush.msra.mxu0 0.0
    %307 = vmatpush.msra.mxu0 0.0
    %308 = vmatpush.msra.mxu0 %v180
    %309 = vmatpush.msra.mxu0 %v177
    %310 = vmatmul.f32.gmra.mxu0 %v289
    %v311 = vpop.f32.mrf.mxu0
    %v312 = vadd.f32 0.0, %v311
    %313 = vmatmul.f32.gmra.mxu0 %v292
    %v314 = vpop.f32.mrf.mxu0
    %v315 = vadd.f32 0.0, %v314
    %316 = vdwg.mxu0
    %v317 = vrcp.pop %v284
    %v318 = vrcp.pop %v287
    %v319 = vmul.f32 %v312, %v317
    %v320 = vmul.f32 %v315, %v318
    %321 = vrot.lane.b32.xlu0 %v140, 120
    %v322 = vpop.permute.xlu0 %321
    %323 = vrot.lane.b32.xlu0 %v143, 120
    %v324 = vpop.permute.xlu0 %323
    %325 = vrot.lane.b32.xlu0 %v140, 88
    %v326 = vpop.permute.xlu0 %325
    %327 = vrot.lane.b32.xlu0 %v143, 88
    %v328 = vpop.permute.xlu0 %327
    %v329 = vsel %vm237, %v322, 0
    %v331 = vsel %vm237, %v324, 0
    %v333 = vsel %vm237, %v326, 0
    %v335 = vsel %vm237, %v328, 0
    %337 = vmatpush.xpose.msra.mxu0 0.0
    %338 = vmatpush.xpose.msra.mxu0 0.0
    %339 = vmatpush.xpose.msra.mxu0 0.0
    %340 = vmatpush.xpose.msra.mxu0 0.0
    %341 = vmatpush.xpose.msra.mxu0 0.0
    %342 = vmatpush.xpose.msra.mxu0 0.0
    %343 = vmatpush.xpose.msra.mxu0 0.0
    %344 = vmatpush.xpose.msra.mxu0 0.0
    %345 = vmatpush.xpose.msra.mxu0 0.0
    %346 = vmatpush.xpose.msra.mxu0 0.0
    %347 = vmatpush.xpose.msra.mxu0 0.0
    %348 = vmatpush.xpose.msra.mxu0 0.0
    %349 = vmatpush.xpose.msra.mxu0 0.0
    %350 = vmatpush.xpose.msra.mxu0 0.0
    %351 = vmatpush.xpose.msra.mxu0 %v335
    %352 = vmatpush.xpose.msra.mxu0 %v333
    %353 = vmatmul.f32.gmra.mxu0 %v329
    %v354 = vpop.f32.mrf.mxu0
    %v355 = vadd.f32 %v225, %v354
    %356 = vmatmul.f32.gmra.mxu0 %v331
    %v357 = vpop.f32.mrf.mxu0
    %v358 = vadd.f32 %v226, %v357
    %359 = vdwg.mxu0
    %v360 = vsel %vm269, %v355, -inf
    %361 = vmax.xlane.f32.xlu0 %v360
    %v362 = vpop.xlane.xlu0 %361
    %v363 = vsel %vm269, %v358, -inf
    %364 = vmax.xlane.f32.xlu0 %v363
    %v365 = vpop.xlane.xlu0 %364
    %v366 = vsub.f32 %v355, %v362
    %v367 = vsub.f32 %v358, %v365
    %v368 = vmul.f32 %v366, 1.442695
    %v369 = vpow.pop %v368
    %v370 = vmul.f32 %v367, 1.442695
    %v371 = vpow.pop %v370
    %v372 = vsel %vm269, %v369, 0.0
    %373 = vadd.xlane.f32.xlu0 %v372
    %v374 = vpop.xlane.xlu0 %373
    %v375 = vsel %vm269, %v371, 0.0
    %376 = vadd.xlane.f32.xlu0 %v375
    %v377 = vpop.xlane.xlu0 %376
    %380 = vrot.lane.b32.xlu0 %v177, 120
    %v381 = vpop.permute.xlu0 %380
    %382 = vrot.lane.b32.xlu0 %v180, 120
    %v383 = vpop.permute.xlu0 %382
    %v387 = vsel %vm269, %v369, 0
    %v390 = vsel %vm269, %v371, 0
    %392 = vmatpush.msra.mxu0 0.0
    %393 = vmatpush.msra.mxu0 0.0
    %394 = vmatpush.msra.mxu0 0.0
    %395 = vmatpush.msra.mxu0 0.0
    %396 = vmatpush.msra.mxu0 0.0
    %397 = vmatpush.msra.mxu0 0.0
    %398 = vmatpush.msra.mxu0 0.0
    %399 = vmatpush.msra.mxu0 0.0
    %400 = vmatpush.msra.mxu0 0.0
    %401 = vmatpush.msra.mxu0 0.0
    %402 = vmatpush.msra.mxu0 0.0
    %403 = vmatpush.msra.mxu0 0.0
    %404 = vmatpush.msra.mxu0 0.0
    %405 = vmatpush.msra.mxu0 0.0
    %406 = vmatpush.msra.mxu0 %v383
    %407 = vmatpush.msra.mxu0 %v381
    %408 = vmatmul.f32.gmra.mxu0 %v387
    %v409 = vpop.f32.mrf.mxu0
    %v410 = vadd.f32 0.0, %v409
    %411 = vmatmul.f32.gmra.mxu0 %v390
    %v412 = vpop.f32.mrf.mxu0
    %v413 = vadd.f32 0.0, %v412
    %414 = vdwg.mxu0
    %v415 = vrcp.pop %v374
    %v416 = vrcp.pop %v377
    %v417 = vmul.f32 %v410, %v415
    %v418 = vmul.f32 %v413, %v416
    %v420 = vsel %vm237, %v417, 0
    %v423 = vsel %vm237, %v418, 0
    %425 = vmatpush.msra.mxu0 0.0
    %426 = vmatpush.msra.mxu0 0.0
    %427 = vmatpush.msra.mxu0 0.0
    %428 = vmatpush.msra.mxu0 0.0
    %429 = vmatpush.msra.mxu0 0.0
    %430 = vmatpush.msra.mxu0 0.0
    %431 = vmatpush.msra.mxu0 0.0
    %432 = vmatpush.msra.mxu0 0.0
    %433 = vmatpush.msra.mxu0 0.0
    %434 = vmatpush.msra.mxu0 0.0
    %435 = vmatpush.msra.mxu0 0.0
    %436 = vmatpush.msra.mxu0 0.0
    %437 = vmatpush.msra.mxu0 0.0
    %438 = vmatpush.msra.mxu0 0.0
    %439 = vmatpush.msra.mxu0 0.0
    %440 = vmatpush.msra.mxu0 %v228
    %441 = vmatmul.f32.gmra.mxu0 %v420
    %v442 = vpop.f32.mrf.mxu0
    %v443 = vadd.f32 0.0, %v442
    %444 = vmatmul.f32.gmra.mxu0 %v423
    %v445 = vpop.f32.mrf.mxu0
    %v446 = vadd.f32 0.0, %v445
    %447 = vdwg.mxu0
    %v449 = vsel %vm237, %v319, 0
    %v452 = vsel %vm237, %v320, 0
    %454 = vmatpush.msra.mxu0 0.0
    %455 = vmatpush.msra.mxu0 0.0
    %456 = vmatpush.msra.mxu0 0.0
    %457 = vmatpush.msra.mxu0 0.0
    %458 = vmatpush.msra.mxu0 0.0
    %459 = vmatpush.msra.mxu0 0.0
    %460 = vmatpush.msra.mxu0 0.0
    %461 = vmatpush.msra.mxu0 0.0
    %462 = vmatpush.msra.mxu0 0.0
    %463 = vmatpush.msra.mxu0 0.0
    %464 = vmatpush.msra.mxu0 0.0
    %465 = vmatpush.msra.mxu0 0.0
    %466 = vmatpush.msra.mxu0 0.0
    %467 = vmatpush.msra.mxu0 0.0
    %468 = vmatpush.msra.mxu0 0.0
    %469 = vmatpush.msra.mxu0 %v227
    %470 = vmatmul.f32.gmra.mxu0 %v449
    %v471 = vpop.f32.mrf.mxu0
    %v472 = vadd.f32 %v443, %v471
    %473 = vmatmul.f32.gmra.mxu0 %v452
    %v474 = vpop.f32.mrf.mxu0
    %v475 = vadd.f32 %v446, %v474
    %476 = vdwg.mxu0
    %477 = vrot.lane.b32.xlu0 %v140, 112
    %v478 = vpop.permute.xlu0 %477
    %479 = vrot.lane.b32.xlu0 %v143, 112
    %v480 = vpop.permute.xlu0 %479
    %481 = vrot.lane.b32.xlu0 %v140, 80
    %v482 = vpop.permute.xlu0 %481
    %483 = vrot.lane.b32.xlu0 %v143, 80
    %v484 = vpop.permute.xlu0 %483
    %v485 = vsel %vm237, %v478, 0
    %v487 = vsel %vm237, %v480, 0
    %v489 = vsel %vm237, %v482, 0
    %v491 = vsel %vm237, %v484, 0
    %493 = vmatpush.xpose.msra.mxu0 0.0
    %494 = vmatpush.xpose.msra.mxu0 0.0
    %495 = vmatpush.xpose.msra.mxu0 0.0
    %496 = vmatpush.xpose.msra.mxu0 0.0
    %497 = vmatpush.xpose.msra.mxu0 0.0
    %498 = vmatpush.xpose.msra.mxu0 0.0
    %499 = vmatpush.xpose.msra.mxu0 0.0
    %500 = vmatpush.xpose.msra.mxu0 0.0
    %501 = vmatpush.xpose.msra.mxu0 0.0
    %502 = vmatpush.xpose.msra.mxu0 0.0
    %503 = vmatpush.xpose.msra.mxu0 0.0
    %504 = vmatpush.xpose.msra.mxu0 0.0
    %505 = vmatpush.xpose.msra.mxu0 0.0
    %506 = vmatpush.xpose.msra.mxu0 0.0
    %507 = vmatpush.xpose.msra.mxu0 %v491
    %508 = vmatpush.xpose.msra.mxu0 %v489
    %509 = vmatmul.f32.gmra.mxu0 %v485
    %v510 = vpop.f32.mrf.mxu0
    %v511 = vadd.f32 %v225, %v510
    %512 = vmatmul.f32.gmra.mxu0 %v487
    %v513 = vpop.f32.mrf.mxu0
    %v514 = vadd.f32 %v226, %v513
    %515 = vdwg.mxu0
    %v516 = vsel %vm269, %v511, -inf
    %517 = vmax.xlane.f32.xlu0 %v516
    %v518 = vpop.xlane.xlu0 %517
    %v519 = vsel %vm269, %v514, -inf
    %520 = vmax.xlane.f32.xlu0 %v519
    %v521 = vpop.xlane.xlu0 %520
    %v522 = vsub.f32 %v511, %v518
    %v523 = vsub.f32 %v514, %v521
    %v524 = vmul.f32 %v522, 1.442695
    %v525 = vpow.pop %v524
    %v526 = vmul.f32 %v523, 1.442695
    %v527 = vpow.pop %v526
    %v528 = vsel %vm269, %v525, 0.0
    %529 = vadd.xlane.f32.xlu0 %v528
    %v530 = vpop.xlane.xlu0 %529
    %v531 = vsel %vm269, %v527, 0.0
    %532 = vadd.xlane.f32.xlu0 %v531
    %v533 = vpop.xlane.xlu0 %532
    %534 = vrot.lane.b32.xlu0 %v177, 112
    %v535 = vpop.permute.xlu0 %534
    %536 = vrot.lane.b32.xlu0 %v180, 112
    %v537 = vpop.permute.xlu0 %536
    %v541 = vsel %vm269, %v525, 0
    %v544 = vsel %vm269, %v527, 0
    %546 = vmatpush.msra.mxu0 0.0
    %547 = vmatpush.msra.mxu0 0.0
    %548 = vmatpush.msra.mxu0 0.0
    %549 = vmatpush.msra.mxu0 0.0
    %550 = vmatpush.msra.mxu0 0.0
    %551 = vmatpush.msra.mxu0 0.0
    %552 = vmatpush.msra.mxu0 0.0
    %553 = vmatpush.msra.mxu0 0.0
    %554 = vmatpush.msra.mxu0 0.0
    %555 = vmatpush.msra.mxu0 0.0
    %556 = vmatpush.msra.mxu0 0.0
    %557 = vmatpush.msra.mxu0 0.0
    %558 = vmatpush.msra.mxu0 0.0
    %559 = vmatpush.msra.mxu0 0.0
    %560 = vmatpush.msra.mxu0 %v537
    %561 = vmatpush.msra.mxu0 %v535
    %562 = vmatmul.f32.gmra.mxu0 %v541
    %v563 = vpop.f32.mrf.mxu0
    %v564 = vadd.f32 0.0, %v563
    %565 = vmatmul.f32.gmra.mxu0 %v544
    %v566 = vpop.f32.mrf.mxu0
    %v567 = vadd.f32 0.0, %v566
    %568 = vdwg.mxu0
    %v569 = vrcp.pop %v530
    %v570 = vrcp.pop %v533
    %v571 = vmul.f32 %v564, %v569
    %v572 = vmul.f32 %v567, %v570
    %v574 = vsel %vm237, %v571, 0
    %v577 = vsel %vm237, %v572, 0
    %579 = vmatpush.msra.mxu0 0.0
    %580 = vmatpush.msra.mxu0 0.0
    %581 = vmatpush.msra.mxu0 0.0
    %582 = vmatpush.msra.mxu0 0.0
    %583 = vmatpush.msra.mxu0 0.0
    %584 = vmatpush.msra.mxu0 0.0
    %585 = vmatpush.msra.mxu0 0.0
    %586 = vmatpush.msra.mxu0 0.0
    %587 = vmatpush.msra.mxu0 0.0
    %588 = vmatpush.msra.mxu0 0.0
    %589 = vmatpush.msra.mxu0 0.0
    %590 = vmatpush.msra.mxu0 0.0
    %591 = vmatpush.msra.mxu0 0.0
    %592 = vmatpush.msra.mxu0 0.0
    %593 = vmatpush.msra.mxu0 0.0
    %594 = vmatpush.msra.mxu0 %v229
    %595 = vmatmul.f32.gmra.mxu0 %v574
    %v596 = vpop.f32.mrf.mxu0
    %v597 = vadd.f32 0.0, %v596
    %598 = vmatmul.f32.gmra.mxu0 %v577
    %v599 = vpop.f32.mrf.mxu0
    %v600 = vadd.f32 0.0, %v599
    %601 = vdwg.mxu0
    %v602 = vadd.f32 %v472, %v597
    %v603 = vadd.f32 %v475, %v600
    %604 = vrot.lane.b32.xlu0 %v140, 104
    %v605 = vpop.permute.xlu0 %604
    %606 = vrot.lane.b32.xlu0 %v143, 104
    %v607 = vpop.permute.xlu0 %606
    %608 = vrot.lane.b32.xlu0 %v140, 72
    %v609 = vpop.permute.xlu0 %608
    %610 = vrot.lane.b32.xlu0 %v143, 72
    %v611 = vpop.permute.xlu0 %610
    %v612 = vsel %vm237, %v605, 0
    %v614 = vsel %vm237, %v607, 0
    %v616 = vsel %vm237, %v609, 0
    %v618 = vsel %vm237, %v611, 0
    %620 = vmatpush.xpose.msra.mxu0 0.0
    %621 = vmatpush.xpose.msra.mxu0 0.0
    %622 = vmatpush.xpose.msra.mxu0 0.0
    %623 = vmatpush.xpose.msra.mxu0 0.0
    %624 = vmatpush.xpose.msra.mxu0 0.0
    %625 = vmatpush.xpose.msra.mxu0 0.0
    %626 = vmatpush.xpose.msra.mxu0 0.0
    %627 = vmatpush.xpose.msra.mxu0 0.0
    %628 = vmatpush.xpose.msra.mxu0 0.0
    %629 = vmatpush.xpose.msra.mxu0 0.0
    %630 = vmatpush.xpose.msra.mxu0 0.0
    %631 = vmatpush.xpose.msra.mxu0 0.0
    %632 = vmatpush.xpose.msra.mxu0 0.0
    %633 = vmatpush.xpose.msra.mxu0 0.0
    %634 = vmatpush.xpose.msra.mxu0 %v618
    %635 = vmatpush.xpose.msra.mxu0 %v616
    %636 = vmatmul.f32.gmra.mxu0 %v612
    %v637 = vpop.f32.mrf.mxu0
    %v638 = vadd.f32 %v225, %v637
    %639 = vmatmul.f32.gmra.mxu0 %v614
    %v640 = vpop.f32.mrf.mxu0
    %v641 = vadd.f32 %v226, %v640
    %642 = vdwg.mxu0
    %v643 = vsel %vm269, %v638, -inf
    %644 = vmax.xlane.f32.xlu0 %v643
    %v645 = vpop.xlane.xlu0 %644
    %v646 = vsel %vm269, %v641, -inf
    %647 = vmax.xlane.f32.xlu0 %v646
    %v648 = vpop.xlane.xlu0 %647
    %v649 = vsub.f32 %v638, %v645
    %v650 = vsub.f32 %v641, %v648
    %v651 = vmul.f32 %v649, 1.442695
    %v652 = vpow.pop %v651
    %v653 = vmul.f32 %v650, 1.442695
    %v654 = vpow.pop %v653
    %v655 = vsel %vm269, %v652, 0.0
    %656 = vadd.xlane.f32.xlu0 %v655
    %v657 = vpop.xlane.xlu0 %656
    %v658 = vsel %vm269, %v654, 0.0
    %659 = vadd.xlane.f32.xlu0 %v658
    %v660 = vpop.xlane.xlu0 %659
    %661 = vrot.lane.b32.xlu0 %v177, 104
    %v662 = vpop.permute.xlu0 %661
    %663 = vrot.lane.b32.xlu0 %v180, 104
    %v664 = vpop.permute.xlu0 %663
    %v668 = vsel %vm269, %v652, 0
    %v671 = vsel %vm269, %v654, 0
    %673 = vmatpush.msra.mxu0 0.0
    %674 = vmatpush.msra.mxu0 0.0
    %675 = vmatpush.msra.mxu0 0.0
    %676 = vmatpush.msra.mxu0 0.0
    %677 = vmatpush.msra.mxu0 0.0
    %678 = vmatpush.msra.mxu0 0.0
    %679 = vmatpush.msra.mxu0 0.0
    %680 = vmatpush.msra.mxu0 0.0
    %681 = vmatpush.msra.mxu0 0.0
    %682 = vmatpush.msra.mxu0 0.0
    %683 = vmatpush.msra.mxu0 0.0
    %684 = vmatpush.msra.mxu0 0.0
    %685 = vmatpush.msra.mxu0 0.0
    %686 = vmatpush.msra.mxu0 0.0
    %687 = vmatpush.msra.mxu0 %v664
    %688 = vmatpush.msra.mxu0 %v662
    %689 = vmatmul.f32.gmra.mxu0 %v668
    %v690 = vpop.f32.mrf.mxu0
    %v691 = vadd.f32 0.0, %v690
    %692 = vmatmul.f32.gmra.mxu0 %v671
    %v693 = vpop.f32.mrf.mxu0
    %v694 = vadd.f32 0.0, %v693
    %695 = vdwg.mxu0
    %v696 = vrcp.pop %v657
    %v697 = vrcp.pop %v660
    %v698 = vmul.f32 %v691, %v696
    %v699 = vmul.f32 %v694, %v697
    %v701 = vsel %vm237, %v698, 0
    %v704 = vsel %vm237, %v699, 0
    %706 = vmatpush.msra.mxu0 0.0
    %707 = vmatpush.msra.mxu0 0.0
    %708 = vmatpush.msra.mxu0 0.0
    %709 = vmatpush.msra.mxu0 0.0
    %710 = vmatpush.msra.mxu0 0.0
    %711 = vmatpush.msra.mxu0 0.0
    %712 = vmatpush.msra.mxu0 0.0
    %713 = vmatpush.msra.mxu0 0.0
    %714 = vmatpush.msra.mxu0 0.0
    %715 = vmatpush.msra.mxu0 0.0
    %716 = vmatpush.msra.mxu0 0.0
    %717 = vmatpush.msra.mxu0 0.0
    %718 = vmatpush.msra.mxu0 0.0
    %719 = vmatpush.msra.mxu0 0.0
    %720 = vmatpush.msra.mxu0 0.0
    %721 = vmatpush.msra.mxu0 %v230
    %722 = vmatmul.f32.gmra.mxu0 %v701
    %v723 = vpop.f32.mrf.mxu0
    %v724 = vadd.f32 0.0, %v723
    %725 = vmatmul.f32.gmra.mxu0 %v704
    %v726 = vpop.f32.mrf.mxu0
    %v727 = vadd.f32 0.0, %v726
    %728 = vdwg.mxu0
    %v729 = vadd.f32 %v602, %v724
    %v730 = vadd.f32 %v603, %v727
    %v731 = vld [vmem:[%s7] sm:$0x1]
    %v733 = vperm.slane %v731, 0
    %v735 = vadd.f32 %v729, %v733
    %v736 = vadd.f32 %v730, %v733
    %v737 = vadd.f32 %v101, %v735
    %v738 = vadd.f32 %v102, %v736
    %v739 = vsel %vm115, %v737, 0.0
    %740 = vadd.xlane.f32.xlu0 %v739
    %v741 = vpop.xlane.xlu0 %740
    %v742 = vsel %vm115, %v738, 0.0
    %743 = vadd.xlane.f32.xlu0 %v742
    %v744 = vpop.xlane.xlu0 %743
    %v745 = vrcp.pop 32.0
    %v746 = vmul.f32 32.0, %v745
    %v747 = vsub.f32 1.0, %v746
    %v748 = vmul.f32 %v745, %v747
    %v749 = vadd.f32 %v745, %v748
    %vm750 = vweird.f32 %v745
    %v751 = vsel %vm750, %v745, %v749
    %v752 = vmul.f32 %v741, %v751
    %v753 = vmul.f32 %v744, %v751
    %v754 = vsub.f32 %v737, %v752
    %v755 = vsub.f32 %v738, %v753
    %v756 = vmul.f32 %v754, %v754
    %v757 = vmul.f32 %v755, %v755
    %v758 = vsel %vm115, %v756, 0.0
    %759 = vadd.xlane.f32.xlu0 %v758
    %v760 = vpop.xlane.xlu0 %759
    %v761 = vsel %vm115, %v757, 0.0
    %762 = vadd.xlane.f32.xlu0 %v761
    %v763 = vpop.xlane.xlu0 %762
    %v764 = vmul.f32 %v760, %v751
    %v765 = vmul.f32 %v763, %v751
    %v766 = vadd.f32 %v764, 1e-05
    %v767 = vadd.f32 %v765, 1e-05
    %v768 = vrsqrt.pop %v766
    %v769 = vmul.f32 %v768, %v766
    %v770 = vmul.f32 %v769, %v768
    %v771 = vmul.f32 0.5, %v770
    %v772 = vsub.f32 1.5, %v771
    %v773 = vmul.f32 %v768, %v772
    %vm774 = vweird.f32 %v766
    %vm775 = vweird.f32 %v768
    %vm776 = vmor %vm774, %vm775
    %v777 = vsel %vm776, %v768, %v773
    %v778 = vrsqrt.pop %v767
    %v779 = vmul.f32 %v778, %v767
    %v780 = vmul.f32 %v779, %v778
    %v781 = vmul.f32 0.5, %v780
    %v782 = vsub.f32 1.5, %v781
    %v783 = vmul.f32 %v778, %v782
    %vm784 = vweird.f32 %v767
    %vm785 = vweird.f32 %v778
    %vm786 = vmor %vm784, %vm785
    %v787 = vsel %vm786, %v778, %v783
    %v788 = vmul.f32 %v754, %v777
    %v789 = vmul.f32 %v755, %v787
    %v790 = vld [vmem:[%s12] sm:$0x1]
    %v792 = vperm.slane %v790, 0
    %v794 = vmul.f32 %v788, %v792
    %v795 = vmul.f32 %v789, %v792
    %v796 = vld [vmem:[%s13] sm:$0x1]
    %v798 = vperm.slane %v796, 0
    %v800 = vadd.f32 %v794, %v798
    %v801 = vadd.f32 %v795, %v798
    %v802 = vld [vmem:[#allocation7] sm:$0xff]
    %v803 = vld [vmem:[#allocation7 + $0x8] sm:$0xff]
    %v804 = vld [vmem:[#allocation7 + $0x10] sm:$0xff]
    %v805 = vld [vmem:[#allocation7 + $0x18] sm:$0xff]
    %v806 = vld [vmem:[%s9] sm:$0x1]
    %v808 = vperm.slane %v806, 0
    %v811 = vsel %vm115, %v800, 0
    %v814 = vsel %vm115, %v801, 0
    %816 = vmatpush.msra.mxu0 0.0
    %817 = vmatpush.msra.mxu0 0.0
    %818 = vmatpush.msra.mxu0 0.0
    %819 = vmatpush.msra.mxu0 0.0
    %820 = vmatpush.msra.mxu0 0.0
    %821 = vmatpush.msra.mxu0 0.0
    %822 = vmatpush.msra.mxu0 0.0
    %823 = vmatpush.msra.mxu0 0.0
    %824 = vmatpush.msra.mxu0 0.0
    %825 = vmatpush.msra.mxu0 0.0
    %826 = vmatpush.msra.mxu0 0.0
    %827 = vmatpush.msra.mxu0 0.0
    %828 = vmatpush.msra.mxu0 %v805
    %829 = vmatpush.msra.mxu0 %v804
    %830 = vmatpush.msra.mxu0 %v803
    %831 = vmatpush.msra.mxu0 %v802
    %832 = vmatmul.f32.gmra.mxu0 %v811
    %v833 = vpop.f32.mrf.mxu0
    %v834 = vadd.f32 %v808, %v833
    %835 = vmatmul.f32.gmra.mxu0 %v814
    %v836 = vpop.f32.mrf.mxu0
    %v837 = vadd.f32 %v808, %v836
    %838 = vdwg.mxu0
    %v839 = vmax.f32 %v834, 0.0
    %v840 = vmax.f32 %v837, 0.0
    %v841 = vld [vmem:[%s10] sm:$0xff]
    %v842 = vld [vmem:[%s10 + $0x8] sm:$0xff]
    %v843 = vld [vmem:[%s10 + $0x10] sm:$0xff]
    %v844 = vld [vmem:[%s10 + $0x18] sm:$0xff]
    %v845 = vld [vmem:[%s10 + $0x20] sm:$0xff]
    %v846 = vld [vmem:[%s10 + $0x28] sm:$0xff]
    %v847 = vld [vmem:[%s10 + $0x30] sm:$0xff]
    %v848 = vld [vmem:[%s10 + $0x38] sm:$0xff]
    %v849 = vld [vmem:[%s11] sm:$0x1]
    %v851 = vperm.slane %v849, 0
    %vm853 = vcmask 523264
    %v855 = vsel %vm853, %v839, 0
    %v858 = vsel %vm853, %v840, 0
    %860 = vmatpush.msra.mxu0 0.0
    %861 = vmatpush.msra.mxu0 0.0
    %862 = vmatpush.msra.mxu0 0.0
    %863 = vmatpush.msra.mxu0 0.0
    %864 = vmatpush.msra.mxu0 0.0
    %865 = vmatpush.msra.mxu0 0.0
    %866 = vmatpush.msra.mxu0 0.0
    %867 = vmatpush.msra.mxu0 0.0
    %868 = vmatpush.msra.mxu0 %v848
    %869 = vmatpush.msra.mxu0 %v847
    %870 = vmatpush.msra.mxu0 %v846
    %871 = vmatpush.msra.mxu0 %v845
    %872 = vmatpush.msra.mxu0 %v844
    %873 = vmatpush.msra.mxu0 %v843
    %874 = vmatpush.msra.mxu0 %v842
    %875 = vmatpush.msra.mxu0 %v841
    %876 = vmatmul.f32.gmra.mxu0 %v855
    %v877 = vpop.f32.mrf.mxu0
    %v878 = vadd.f32 %v851, %v877
    %879 = vmatmul.f32.gmra.mxu0 %v858
    %v880 = vpop.f32.mrf.mxu0
    %v881 = vadd.f32 %v851, %v880
    %882 = vdwg.mxu0
    %v883 = vadd.f32 %v800, %v878
    %v884 = vadd.f32 %v801, %v881
    %v885 = vsel %vm115, %v883, 0.0
    %886 = vadd.xlane.f32.xlu0 %v885
    %v887 = vpop.xlane.xlu0 %886
    %v888 = vsel %vm115, %v884, 0.0
    %889 = vadd.xlane.f32.xlu0 %v888
    %v890 = vpop.xlane.xlu0 %889
    %v891 = vmul.f32 %v887, %v751
    %v892 = vmul.f32 %v890, %v751
    %v893 = vsub.f32 %v883, %v891
    %v894 = vsub.f32 %v884, %v892
    %v895 = vmul.f32 %v893, %v893
    %v896 = vmul.f32 %v894, %v894
    %v897 = vsel %vm115, %v895, 0.0
    %898 = vadd.xlane.f32.xlu0 %v897
    %v899 = vpop.xlane.xlu0 %898
    %v900 = vsel %vm115, %v896, 0.0
    %901 = vadd.xlane.f32.xlu0 %v900
    %v902 = vpop.xlane.xlu0 %901
    %v903 = vmul.f32 %v899, %v751
    %v904 = vmul.f32 %v902, %v751
    %v905 = vadd.f32 %v903, 1e-05
    %v906 = vadd.f32 %v904, 1e-05
    %v907 = vrsqrt.pop %v905
    %v908 = vmul.f32 %v907, %v905
    %v909 = vmul.f32 %v908, %v907
    %v910 = vmul.f32 0.5, %v909
    %v911 = vsub.f32 1.5, %v910
    %v912 = vmul.f32 %v907, %v911
    %vm913 = vweird.f32 %v905
    %vm914 = vweird.f32 %v907
    %vm915 = vmor %vm913, %vm914
    %v916 = vsel %vm915, %v907, %v912
    %v917 = vrsqrt.pop %v906
    %v918 = vmul.f32 %v917, %v906
    %v919 = vmul.f32 %v918, %v917
    %v920 = vmul.f32 0.5, %v919
    %v921 = vsub.f32 1.5, %v920
    %v922 = vmul.f32 %v917, %v921
    %vm923 = vweird.f32 %v906
    %vm924 = vweird.f32 %v917
    %vm925 = vmor %vm923, %vm924
    %v926 = vsel %vm925, %v917, %v922
    %v927 = vmul.f32 %v893, %v916
    %v928 = vmul.f32 %v894, %v926
    %v929 = vld [vmem:[%s14] sm:$0x1]
    %v931 = vperm.slane %v929, 0
    %v933 = vmul.f32 %v927, %v931
    %v934 = vmul.f32 %v928, %v931
    %v935 = vld [vmem:[%s15] sm:$0x1]
    %v937 = vperm.slane %v935, 0
    %v939 = vadd.f32 %v933, %v937
    %v940 = vadd.f32 %v934, %v937
    %941 = vst.msk [vmem:[#allocation8] sm:$0xff] %vm115, %v939
    %942 = vst.msk [vmem:[#allocation8 + $0x8] sm:$0xff] %vm115, %v940
    // Predicated region
    $region78: #{tpu_custom_call.1} parent=1 // pred_check
      _
    $region79: #{tpu_custom_call.1} parent=1 // pred_check_branch
      %944 = sbr.rel (0) target = $region81
    $region80: #{tpu_custom_call.1} parent=1 // pred_region
      %946 = vsyncadd [#allocation4], 0
      %s947 = sshll.u32 [#allocation8], 4
      %s948 = int_to_ptr.vmem [resolvable:$true] %s947
      %s949 = sshll.u32 %s16, 4
      %s950 = int_to_ptr.hbm [resolvable:$true] %s949
      %955 = dma.vmem_to_hbm [thread:$0]  %s948, 256, %s950, [#allocation4], 128, 128, 8
    $region81: #{tpu_custom_call.1} parent=1 // pred_fallthru
      _
    // Predicated region
    $region82: #{tpu_custom_call.1} parent=1 // pred_check
      _
    $region83: #{tpu_custom_call.1} parent=1 // pred_check_branch
      %957 = sbr.rel (0) target = $region85
    $region84: #{tpu_custom_call.1} parent=1 // pred_region
      %959 = dma.done [#allocation4], 256
    $region85: #{tpu_custom_call.1} parent=1 // pred_fallthru
      _
    %960 = vsyncpa [#allocation3], 1
    %961 = vsyncpa [#allocation6], 1
    %962 = vsyncpa [#allocation4], 1

</llo_original>
